<compile_context>
chip_gen: v6e
topology: v6e:2x2x1
jax: 0.10.0
libtpu: 0.0.40
codegen_flags: <defaults>
</compile_context>

<pallas_src>
import functools

import jax
import jax.numpy as jnp
from jax.experimental import pallas as pl
from jax.experimental.pallas import tpu as pltpu

LANE = 128                            # vreg lane width
ACC_SUBLANES = 8                      # f32 vreg sublane count
SLICE_ROWS = 16                       # per-iteration sublane slice (f32: 2 vregs, bf16: 1)
TARGET_BLOCK_BYTES = 1 << 20          # ~1 MiB blocks: ~85% of measured HBM roofline
VMEM_LIMIT_BYTES = 32 * 1024 * 1024   # explicit limit, sized against v7x (64 MiB physical)
MIN_PALLAS_ELEMS = SLICE_ROWS * LANE  # 2048: below this, dispatch overhead >> work
MAX_CLASSES_PALLAS = 2048             # class-major CE keeps all classes on sublanes


def _cdiv(a, b):
    return (a + b - 1) // b


def _round_up(a, b):
    return _cdiv(a, b) * b


def _round_down(a, b):
    return (a // b) * b


def _num_tensorcores():
    """2 on dual-TensorCore chips (v7x) so the 'parallel' axis uses both cores; else 1."""
    try:
        info = pltpu.get_tpu_info()
        for name in ("num_tensorcores", "tensorcore_count", "num_cores", "cores_per_chip"):
            v = getattr(info, name, None)
            if v:
                return max(1, int(v))
    except Exception:
        pass
    try:
        return max(1, int(getattr(jax.devices()[0], "num_cores", 1) or 1))
    except Exception:
        return 1


# --------------------------- XLA reference helpers ---------------------------
def _smooth_l1_sum_xla(preds, targets):
    d = preds.astype(jnp.float32) - targets.astype(jnp.float32)
    ad = jnp.abs(d)
    c = jnp.minimum(ad, 1.0)
    return jnp.sum(c * (ad - 0.5 * c))


def _cross_entropy_xla(scores, targets):
    logz = jax.nn.log_softmax(scores.astype(jnp.float32), axis=-1)
    return -jnp.mean(jnp.take_along_axis(logz, targets.astype(jnp.int32)[:, None], axis=1))


# ----------------------------- SmoothL1 (sum) -------------------------------
def _smooth_l1_tile_kernel(p_ref, t_ref, out_ref, acc_ref, *,
                           tile_rows, tiles_per_split, n_valid_rows,
                           slice_rows, unroll):
    split = pl.program_id(0)
    i = pl.program_id(1)

    @pl.when(i == 0)
    def _init():
        acc_ref[...] = jnp.zeros_like(acc_ref)

    # Logical global row of this tile's first row (used for masking the ragged tail).
    row0 = (split * tiles_per_split + i) * tile_rows
    local_rows = jax.lax.broadcasted_iota(jnp.int32, (slice_rows, LANE), 0)  # hoisted

    def body(s, acc):
        base = pl.multiple_of(s * slice_rows, slice_rows)
        # Slice-wise compute straight from the block ref: only a few vregs live per
        # step (no full-tile f32 materialisation -> no spills at 1 MiB tiles).
        d = (p_ref[pl.ds(base, slice_rows), :].astype(jnp.float32)
             - t_ref[pl.ds(base, slice_rows), :].astype(jnp.float32))
        ad = jnp.abs(d)
        c = jnp.minimum(ad, 1.0)                  # branchless smooth-L1 (beta=1)
        per = c * (ad - 0.5 * c)
        # Mask rows past the real extent (only the final partial tile has any; the
        # cmp+select is free filler on this memory-bound kernel).
        per = jnp.where(row0 + base + local_rows < n_valid_rows, per, 0.0)
        # Fold slice_rows -> ACC_SUBLANES with pure VPU adds on static, aligned slices.
        folded = per[0:ACC_SUBLANES, :]
        for k in range(1, slice_rows // ACC_SUBLANES):
            folded = folded + per[k * ACC_SUBLANES:(k + 1) * ACC_SUBLANES, :]
        return acc + folded

    acc = jax.lax.fori_loop(0, tile_rows // slice_rows, body,
                            jnp.zeros((ACC_SUBLANES, LANE), jnp.float32),
                            unroll=unroll)
    acc_ref[...] += acc

    @pl.when(i == pl.num_programs(1) - 1)
    def _finalize():
        # One sublane (XLU) reduce per core split, only at the very end.
        out_ref[...] = jnp.sum(acc_ref[...], axis=0, keepdims=True)


def smooth_l1_loss(preds, targets, *, min_pallas_elems=MIN_PALLAS_ELEMS):
    """SmoothL1Loss.forward: SUM of elementwise smooth-L1 (beta=1) of preds - targets.
    (The reference module explicitly uses torch.sum, not the nn default 'mean'.)"""
    assert preds.shape == targets.shape, (preds.shape, targets.shape)
    total = preds.size

    if total < min_pallas_elems:
        # Kernel dispatch overhead dwarfs the work at tiny sizes; let XLA fuse it.
        return _smooth_l1_sum_xla(preds, targets)

    p = preds.reshape(-1)
    t = targets.reshape(-1)
    rem = total % LANE
    if rem:
        # Only the rare lane-unaligned case pays a pad copy; the common aligned case
        # ([N,4] boxes with N % 32 == 0) is a free reshape: no extra HBM traffic.
        pad = LANE - rem
        p = jnp.pad(p, (0, pad))
        t = jnp.pad(t, (0, pad))
    rows = p.size // LANE
    p = p.reshape(rows, LANE)
    t = t.reshape(rows, LANE)

    itemsize = preds.dtype.itemsize
    max_tile_rows = max(SLICE_ROWS,
                        _round_down(TARGET_BLOCK_BYTES // (LANE * itemsize), 64))
    num_splits = _num_tensorcores()

    tile_rows = max(SLICE_ROWS,
                    min(max_tile_rows, _round_down(_cdiv(rows, num_splits), SLICE_ROWS)))
    tiles_per_split = _cdiv(rows, num_splits * tile_rows)
    if num_splits > 1 and tiles_per_split * tile_rows >= rows:
        # A second core split would get no valid rows -> single split.
        num_splits = 1
        tile_rows = max(SLICE_ROWS, min(max_tile_rows, _round_down(rows, SLICE_ROWS)))
        tiles_per_split = _cdiv(rows, tile_rows)
    max_blk = _cdiv(rows, tile_rows) - 1

    def in_map(split, i, tps=tiles_per_split, mb=max_blk):
        # Clamp so a (rare) fully-out-of-range logical tile re-reads the last valid
        # block instead of issuing an OOB DMA; its contribution is masked to zero.
        return (jnp.minimum(split * tps + i, mb), 0)

    kern = functools.partial(
        _smooth_l1_tile_kernel,
        tile_rows=tile_rows, tiles_per_split=tiles_per_split,
        n_valid_rows=rows, slice_rows=SLICE_ROWS,
        unroll=min(4, max(1, tile_rows // SLICE_ROWS)))

    partials = pl.pallas_call(
        kern,
        out_shape=jax.ShapeDtypeStruct((num_splits, LANE), jnp.float32),
        grid_spec=pltpu.PrefetchScalarGridSpec(
            num_scalar_prefetch=0,
            grid=(num_splits, tiles_per_split),
            in_specs=[
                pl.BlockSpec((tile_rows, LANE), in_map),
                pl.BlockSpec((tile_rows, LANE), in_map),
            ],
            out_specs=pl.BlockSpec((1, LANE), lambda split, i: (split, 0)),
            scratch_shapes=[pltpu.VMEM((ACC_SUBLANES, LANE), jnp.float32)],
        ),
        compiler_params=pltpu.CompilerParams(
            dimension_semantics=("parallel", "arbitrary"),
            vmem_limit_bytes=VMEM_LIMIT_BYTES),
    )(p, t)
    # Tiny final cross-lane reduce done by XLA.
    return jnp.sum(partials)


# --------------------------- CrossEntropy (mean) ----------------------------
def _pick_tn(n, c, itemsize):
    """Lane-tile over N for class-major (C, N) blocks: ~1 MiB per block, multiple of 128."""
    if n <= LANE:
        return n                                        # one full-extent block
    per_col = max(1, c * itemsize)
    tn = _round_down(max(LANE, TARGET_BLOCK_BYTES // per_col), LANE)
    tn = max(LANE, min(tn, 8192))
    return min(tn, _round_down(n, LANE))                # last block is a standard partial


def _cross_entropy_kernel(s_ref, t_ref, out_ref, acc_ref, *, tn, n_valid, acc_lanes):
    i = pl.program_id(0)

    @pl.when(i == 0)
    def _init():
        acc_ref[...] = jnp.zeros_like(acc_ref)

    s = s_ref[...].astype(jnp.float32)                  # (C, TN) class-major, lane-dense in N
    t = t_ref[...]                                      # (1, TN) int32 labels
    m = jnp.max(s, axis=0, keepdims=True)               # cheap sublane reduces (small C)
    lse = m + jnp.log(jnp.sum(jnp.exp(s - m), axis=0, keepdims=True))
    cls = jax.lax.broadcasted_iota(jnp.int32, s.shape, 0)
    # NOTE: out-of-range labels silently contribute picked=0 (no ignore_index semantics).
    picked = jnp.sum(jnp.where(cls == t, s, 0.0), axis=0, keepdims=True)
    col = i * tn + jax.lax.broadcasted_iota(jnp.int32, (1, tn), 1)
    ce = jnp.where(col < n_valid, lse - picked, 0.0)    # mask the final partial tile

    folded = ce[:, 0:acc_lanes]
    for k in range(1, tn // acc_lanes):
        folded = folded + ce[:, k * acc_lanes:(k + 1) * acc_lanes]
    acc_ref[...] += folded

    @pl.when(i == pl.num_programs(0) - 1)
    def _finalize():
        out_ref[...] = acc_ref[...]


def cross_entropy_loss(scores, targets, *, min_pallas_elems=MIN_PALLAS_ELEMS):
    """nn.CrossEntropyLoss() (mean reduction) over [N, C] logits and [N] int labels."""
    n, c = scores.shape
    if n * c < min_pallas_elems or c > MAX_CLASSES_PALLAS:
        return _cross_entropy_xla(scores, targets)

    s_cm = scores.T                                     # class-major: RoIs on the lane axis
    t = targets.astype(jnp.int32).reshape(1, n)
    tn = _pick_tn(n, c, scores.dtype.itemsize)
    acc_lanes = LANE if tn % LANE == 0 else tn

    kern = functools.partial(_cross_entropy_kernel, tn=tn, n_valid=n, acc_lanes=acc_lanes)
    partial_sums = pl.pallas_call(
        kern,
        out_shape=jax.ShapeDtypeStruct((1, acc_lanes), jnp.float32),
        grid_spec=pltpu.PrefetchScalarGridSpec(
            num_scalar_prefetch=0,
            grid=(_cdiv(n, tn),),
            in_specs=[
                pl.BlockSpec((c, tn), lambda i: (0, i)),
                pl.BlockSpec((1, tn), lambda i: (0, i)),
            ],
            out_specs=pl.BlockSpec((1, acc_lanes), lambda i: (0, 0)),
            scratch_shapes=[pltpu.VMEM((1, acc_lanes), jnp.float32)],
        ),
        compiler_params=pltpu.CompilerParams(
            dimension_semantics=("arbitrary",),
            vmem_limit_bytes=VMEM_LIMIT_BYTES),
    )(s_cm, t)
    return jnp.sum(partial_sums) / n


# ------------------------- Fused MultiTaskLoss kernel ------------------------
def _multi_task_kernel(s_ref, p_ref, t_ref, out_ref, acc_ref, *,
                       tn, n_valid, acc_lanes, inv_n):
    i = pl.program_id(0)

    @pl.when(i == 0)
    def _init():
        acc_ref[...] = jnp.zeros_like(acc_ref)

    s = s_ref[...].astype(jnp.float32)                  # (C, TN) class-major logits
    p = p_ref[...].astype(jnp.float32)                  # (2, TN) preds columns 0/1
    t = t_ref[...]                                      # (1, TN) int32 labels

    # --- CrossEntropy term (mean over N -> scaled by 1/N here) ---
    m = jnp.max(s, axis=0, keepdims=True)
    lse = m + jnp.log(jnp.sum(jnp.exp(s - m), axis=0, keepdims=True))
    cls = jax.lax.broadcasted_iota(jnp.int32, s.shape, 0)
    picked = jnp.sum(jnp.where(cls == t, s, 0.0), axis=0, keepdims=True)
    ce = lse - picked

    # --- summed SmoothL1 term on the indicator-gathered column (0 or 1) ---
    tnz = t != 0
    sc = jnp.where(tnz, s[1:2, :], s[0:1, :])
    pd = jnp.where(tnz, p[1:2, :], p[0:1, :])
    d = sc - pd
    ad = jnp.abs(d)
    cmin = jnp.minimum(ad, 1.0)                         # branchless smooth-L1 (beta=1)
    loc = cmin * (ad - 0.5 * cmin)

    col = i * tn + jax.lax.broadcasted_iota(jnp.int32, (1, tn), 1)
    contrib = jnp.where(col < n_valid, ce * inv_n + loc, 0.0)

    folded = contrib[:, 0:acc_lanes]
    for k in range(1, tn // acc_lanes):
        folded = folded + contrib[:, k * acc_lanes:(k + 1) * acc_lanes]
    acc_ref[...] += folded

    @pl.when(i == pl.num_programs(0) - 1)
    def _finalize():
        out_ref[...] = acc_ref[...]


def _multi_task_loss_xla(scores, preds, targets):
    n = targets.shape[0]
    ce = _cross_entropy_xla(scores, targets)
    ind = (targets != 0).astype(jnp.int32)[:, None]
    a = jnp.take_along_axis(scores, ind, axis=1)[:, 0]
    b = jnp.take_along_axis(preds, ind, axis=1)[:, 0]
    return ce + _smooth_l1_sum_xla(a, b)


def multi_task_loss(scores, preds, targets, lam=1.0):
    """MultiTaskLoss.forward as ONE fused pallas_call (single dispatch, scores read once).
    `lam` kept for signature parity; the reference forward adds the terms without it."""
    del lam
    n, c = scores.shape
    assert c >= 2, "need at least background + 1 foreground class"
    if c > MAX_CLASSES_PALLAS:
        return _multi_task_loss_xla(scores, preds, targets)

    # TODO(synk): the original `scores[range(N), indicator(targets)]` /
    # `preds[range(N), indicator(preds)]` is ill-defined PyTorch boolean fancy indexing
    # (raises for general shapes); we keep the closest well-defined reading: gather
    # column (targets != 0) from both tensors, then summed smooth-L1.
    s_cm = scores.T                                     # (C, N) class-major, lane-dense in N
    p_cm = preds.T[:2, :]                               # (2, N): only columns 0/1 are gathered
    t = targets.astype(jnp.int32).reshape(1, n)
    tn = _pick_tn(n, c, scores.dtype.itemsize)
    acc_lanes = LANE if tn % LANE == 0 else tn

    kern = functools.partial(_multi_task_kernel, tn=tn, n_valid=n,
                             acc_lanes=acc_lanes, inv_n=1.0 / n)
    partial_sums = pl.pallas_call(
        kern,
        out_shape=jax.ShapeDtypeStruct((1, acc_lanes), jnp.float32),
        grid_spec=pltpu.PrefetchScalarGridSpec(
            num_scalar_prefetch=0,
            grid=(_cdiv(n, tn),),
            in_specs=[
                pl.BlockSpec((c, tn), lambda i: (0, i)),
                pl.BlockSpec((2, tn), lambda i: (0, i)),
                pl.BlockSpec((1, tn), lambda i: (0, i)),
            ],
            out_specs=pl.BlockSpec((1, acc_lanes), lambda i: (0, 0)),
            scratch_shapes=[pltpu.VMEM((1, acc_lanes), jnp.float32)],
        ),
        compiler_params=pltpu.CompilerParams(
            dimension_semantics=("arbitrary",),
            vmem_limit_bytes=VMEM_LIMIT_BYTES),
    )(s_cm, p_cm, t)
    return jnp.sum(partial_sums)


# ----------------------------------- test -----------------------------------
if __name__ == "__main__":
    key = jax.random.PRNGKey(0)
    k1, k2, k3, k4 = jax.random.split(key, 4)

    N, C = 512, 21  # N RoIs, C classes (incl. background)
    scores = jax.random.normal(k1, (N, C), dtype=jnp.float32)
    preds = jax.random.normal(k2, (N, 4), dtype=jnp.float32) * 2.0
    box_targets = jax.random.normal(k3, (N, 4), dtype=jnp.float32) * 2.0
    cls_targets = jax.random.randint(k4, (N,), 0, C, dtype=jnp.int32)

    # 1) SmoothL1 kernel, f32, lane-aligned (free reshape, no pad copy)
    loc = smooth_l1_loss(preds, box_targets)
    jax.block_until_ready(loc)
    loc_ref = _smooth_l1_sum_xla(preds, box_targets)
    assert jnp.allclose(loc, loc_ref, rtol=1e-4, atol=1e-3), (loc, loc_ref)

    # 2) SmoothL1 kernel, bf16 inputs kept bf16 through the DMA (halved HBM traffic)
    loc_bf16 = smooth_l1_loss(preds.astype(jnp.bfloat16), box_targets.astype(jnp.bfloat16))
    jax.block_until_ready(loc_bf16)
    ref_bf16 = _smooth_l1_sum_xla(preds.astype(jnp.bfloat16), box_targets.astype(jnp.bfloat16))
    assert jnp.allclose(loc_bf16, ref_bf16, rtol=1e-3, atol=1e-2), (loc_bf16, ref_bf16)

    # 3) SmoothL1 kernel, lane-unaligned shape exercising the in-kernel row masking
    pu = jax.random.normal(k2, (300, 7), dtype=jnp.float32)
    tu = jax.random.normal(k3, (300, 7), dtype=jnp.float32)
    loc_u = smooth_l1_loss(pu, tu)
    jax.block_until_ready(loc_u)
    assert jnp.allclose(loc_u, _smooth_l1_sum_xla(pu, tu), rtol=1e-4, atol=1e-3)

    # 4) CrossEntropy kernel (class-major, lane-dense, tiled over N)
    ce = cross_entropy_loss(scores, cls_targets)
    jax.block_until_ready(ce)
    ce_ref = _cross_entropy_xla(scores, cls_targets)
    assert jnp.allclose(ce, ce_ref, rtol=1e-4, atol=1e-4), (ce, ce_ref)

    # 5) CrossEntropy with N not a multiple of the lane tile (masked partial tile)
    ce_u = cross_entropy_loss(scores[:300], cls_targets[:300])
    jax.block_until_ready(ce_u)
    assert jnp.allclose(ce_u, _cross_entropy_xla(scores[:300], cls_targets[:300]),
                        rtol=1e-4, atol=1e-4)

    # 6) Fused MultiTaskLoss (single pallas_call)
    mt = multi_task_loss(scores, preds, cls_targets)
    jax.block_until_ready(mt)
    ind = (cls_targets != 0).astype(jnp.int32)[:, None]
    a = jnp.take_along_axis(scores, ind, axis=1)[:, 0]
    b = jnp.take_along_axis(preds, ind, axis=1)[:, 0]
    mt_ref = ce_ref + _smooth_l1_sum_xla(a, b)
    assert jnp.allclose(mt, mt_ref, rtol=1e-4, atol=1e-3), (mt, mt_ref)

    print("KERNEL_OK")
</pallas_src>

<mosaic_0001>
module attributes {stable_mosaic.version = 11 : i64} {
  func.func @_smooth_l1_tile_kernel(%arg0: i32, %arg1: i32, %arg2: memref<16x128xf32, #tpu.memory_space<vmem>>, %arg3: memref<16x128xf32, #tpu.memory_space<vmem>>, %arg4: memref<1x128xf32, #tpu.memory_space<vmem>>, %arg5: memref<8x128xf32, #tpu.memory_space<vmem>>) attributes {dimension_semantics = [#tpu.dimension_semantics<parallel>, #tpu.dimension_semantics<arbitrary>], iteration_bounds = array<i64: 1, 1>, scalar_prefetch = 0 : i64, scratch_operands = 1 : i64, tpu.core_type = #tpu.core_type<tc>, window_params = [{transform_indices = @transform_0, window_bounds = array<i64: 16, 128>}, {transform_indices = @transform_1, window_bounds = array<i64: 16, 128>}, {transform_indices = @transform_2, window_bounds = array<i64: 1, 128>}]} {
    %c0_i32 = arith.constant 0 : i32
    %0 = arith.cmpi eq, %arg1, %c0_i32 : i32
    %1 = arith.extui %0 : i1 to i32
    %c0_i32_0 = arith.constant 0 : i32
    %2 = arith.cmpi ne, %1, %c0_i32_0 : i32
    scf.if %2 {
      %cst_15 = arith.constant 0.000000e+00 : f32
      %39 = vector.broadcast %cst_15 : f32 to vector<8x128xf32>
      %c0_16 = arith.constant 0 : index
      %c0_17 = arith.constant 0 : index
      %40 = vector.load %arg5[%c0_16, %c0_17] : memref<8x128xf32, #tpu.memory_space<vmem>>, vector<8x128xf32>
      tpu.vector_store %arg5[%c0_16, %c0_17], %39 {strides = array<i32>} : memref<8x128xf32, #tpu.memory_space<vmem>>, vector<8x128xf32>,
    } else {
    }
    %c1_i32 = arith.constant 1 : i32
    %3 = arith.muli %arg0, %c1_i32 : i32
    %4 = arith.addi %3, %arg1 : i32
    %c16_i32 = arith.constant 16 : i32
    %5 = arith.muli %4, %c16_i32 : i32
    %6 = tpu.iota {dimensions = array<i32: 0>} : vector<16x128xi32>
    %cst = arith.constant 0.000000e+00 : f32
    %7 = vector.broadcast %cst : f32 to vector<8x128xf32>
    %c0_i32_1 = arith.constant 0 : i32
    %c16_i32_2 = arith.constant 16 : i32
    %8 = arith.muli %c0_i32_1, %c16_i32_2 : i32
    %9 = tpu.assume_multiple %8, 16 : i32
    %10 = arith.index_cast %9 : i32 to index
    %c0 = arith.constant 0 : index
    %11 = vector.load %arg2[%10, %c0] : memref<16x128xf32, #tpu.memory_space<vmem>>, vector<16x128xf32>
    %12 = arith.index_cast %9 : i32 to index
    %c0_3 = arith.constant 0 : index
    %13 = vector.load %arg3[%12, %c0_3] : memref<16x128xf32, #tpu.memory_space<vmem>>, vector<16x128xf32>
    %14 = arith.subf %11, %13 : vector<16x128xf32>
    %15 = math.absf %14 : vector<16x128xf32>
    %cst_4 = arith.constant 1.000000e+00 : f32
    %16 = vector.broadcast %cst_4 : f32 to vector<16x128xf32>
    %17 = arith.minimumf %15, %16 : vector<16x128xf32>
    %cst_5 = arith.constant 5.000000e-01 : f32
    %18 = vector.broadcast %cst_5 : f32 to vector<16x128xf32>
    %19 = arith.mulf %18, %17 : vector<16x128xf32>
    %20 = arith.subf %15, %19 : vector<16x128xf32>
    %21 = arith.mulf %17, %20 : vector<16x128xf32>
    %22 = arith.addi %5, %9 : i32
    %23 = vector.broadcast %22 : i32 to vector<16x128xi32>
    %24 = arith.addi %23, %6 : vector<16x128xi32>
    %c16_i32_6 = arith.constant 16 : i32
    %25 = vector.broadcast %c16_i32_6 : i32 to vector<16x128xi32>
    %26 = arith.cmpi slt, %24, %25 : vector<16x128xi32>
    %cst_7 = arith.constant 0.000000e+00 : f32
    %27 = vector.broadcast %cst_7 : f32 to vector<16x128xf32>
    %28 = arith.select %26, %21, %27 : vector<16x128xi1>, vector<16x128xf32>
    %29 = vector.extract_strided_slice %28 {offsets = [0, 0], sizes = [8, 128], strides = [1, 1]} : vector<16x128xf32> to vector<8x128xf32>
    %30 = vector.extract_strided_slice %28 {offsets = [8, 0], sizes = [8, 128], strides = [1, 1]} : vector<16x128xf32> to vector<8x128xf32>
    %31 = arith.addf %29, %30 : vector<8x128xf32>
    %32 = arith.addf %7, %31 : vector<8x128xf32>
    %c1_i32_8 = arith.constant 1 : i32
    %c0_9 = arith.constant 0 : index
    %c0_10 = arith.constant 0 : index
    %33 = vector.load %arg5[%c0_9, %c0_10] : memref<8x128xf32, #tpu.memory_space<vmem>>, vector<8x128xf32>
    %34 = arith.addf %33, %32 : vector<8x128xf32>
    %c0_11 = arith.constant 0 : index
    %c0_12 = arith.constant 0 : index
    %35 = vector.load %arg5[%c0_11, %c0_12] : memref<8x128xf32, #tpu.memory_space<vmem>>, vector<8x128xf32>
    tpu.vector_store %arg5[%c0_11, %c0_12], %34 {strides = array<i32>} : memref<8x128xf32, #tpu.memory_space<vmem>>, vector<8x128xf32>,
    %c0_i32_13 = arith.constant 0 : i32
    %36 = arith.cmpi eq, %arg1, %c0_i32_13 : i32
    %37 = arith.extui %36 : i1 to i32
    %c0_i32_14 = arith.constant 0 : i32
    %38 = arith.cmpi ne, %37, %c0_i32_14 : i32
    scf.if %38 {
      %c0_15 = arith.constant 0 : index
      %c0_16 = arith.constant 0 : index
      %39 = vector.load %arg5[%c0_15, %c0_16] : memref<8x128xf32, #tpu.memory_space<vmem>>, vector<8x128xf32>
      %cst_17 = arith.constant dense<0.000000e+00> : vector<128xf32>
      %40 = vector.multi_reduction <add>, %39, %cst_17 [0] : vector<8x128xf32> to vector<128xf32>
      %41 = vector.shape_cast %40 : vector<128xf32> to vector<1x128xf32>
      %c0_18 = arith.constant 0 : index
      %c0_19 = arith.constant 0 : index
      %42 = vector.load %arg4[%c0_18, %c0_19] : memref<1x128xf32, #tpu.memory_space<vmem>>, vector<1x128xf32>
      tpu.vector_store %arg4[%c0_18, %c0_19], %41 {strides = array<i32>} : memref<1x128xf32, #tpu.memory_space<vmem>>, vector<1x128xf32>,
    } else {
    }
    return
  }
  func.func @transform_0(%arg0: i32, %arg1: i32) -> (i32, i32) {
    %c1_i32 = arith.constant 1 : i32
    %0 = arith.muli %arg0, %c1_i32 : i32
    %1 = arith.addi %0, %arg1 : i32
    %c0_i32 = arith.constant 0 : i32
    %2 = arith.minsi %1, %c0_i32 : i32
    %c0_i32_0 = arith.constant 0 : i32
    %c0_i32_1 = arith.constant 0 : i32
    return %2, %c0_i32_0 : i32, i32
  }
  func.func @transform_1(%arg0: i32, %arg1: i32) -> (i32, i32) {
    %c1_i32 = arith.constant 1 : i32
    %0 = arith.muli %arg0, %c1_i32 : i32
    %1 = arith.addi %0, %arg1 : i32
    %c0_i32 = arith.constant 0 : i32
    %2 = arith.minsi %1, %c0_i32 : i32
    %c0_i32_0 = arith.constant 0 : i32
    %c0_i32_1 = arith.constant 0 : i32
    return %2, %c0_i32_0 : i32, i32
  }
  func.func @transform_2(%arg0: i32, %arg1: i32) -> (i32, i32) {
    %c0_i32 = arith.constant 0 : i32
    %c0_i32_0 = arith.constant 0 : i32
    return %arg0, %c0_i32 : i32, i32
  }
}

</mosaic_0001>

<llo_original>
// kernel: tpu_custom_call.1
$region0: #{tpu_custom_call.1}
  #allocation0 [shape = 'u32[]', space=smem, size = 0x4, offset = 0x4, fixed_abs, tag = 'smem constant byte address 0x4 - core index']
  #allocation1 [shape = 'u32[144,128]{1,0:T(1,128)}', space=vmem, size = 0x12000, scoped, tag = 'internal scratch']
  #allocation2 [shape = 'f32[8,128]{1,0:T(8,128)}', space=vmem, size = 0x1000, scoped, tag = 'scratch operand']
  %s0 = inlined_call_operand.hbm [shape: f32[16,128], index: 0, kind: input, shape index: {}]
  %s1 = inlined_call_operand.hbm [shape: f32[16,128], index: 1, kind: input, shape index: {}]
  %s2 = inlined_call_operand.hbm [shape: f32[1,128], index: 2, kind: output, shape index: {}]
  %s3 = sld [smem:[#allocation0]]
  $region34: #{tpu_custom_call.1} parent=0
    _
  %s5 = ssub.s32 1, %s3
  %s6 = scalar_select 0, %s5, %s3
  $region1: #{tpu_custom_call.1} parent=0
    #allocation3 [shape = 'u8[8192]{0}', space=vmem, size = 0x2000, scoped, tag = 'input window, operand 0, single buffered']
    #allocation4 [shape = 's32[1]{0}', space=sflag, size = 0x4, scoped, tag = 'scoped memory for tpu_custom_call.1']
    #allocation5 [shape = 's32[1]{0}', space=sflag, size = 0x4, scoped, tag = 'scoped memory for tpu_custom_call.1']
    #allocation6 [shape = 'u8[8192]{0}', space=vmem, size = 0x2000, scoped, tag = 'input window, operand 1, single buffered']
    #allocation7 [shape = 's32[1]{0}', space=sflag, size = 0x4, scoped, tag = 'scoped memory for tpu_custom_call.1']
    #allocation8 [shape = 'u8[512]{0}', space=vmem, size = 0x400, scoped, tag = 'output window, operand 0, single buffered']
    %7 = vsyncpa [#allocation4], 0
    %8 = vsyncpa [#allocation7], 0
    %9 = vsyncpa [#allocation5], 0
    // Predicated region
    $region2: #{tpu_custom_call.1} parent=1 // pred_check
      _
    $region3: #{tpu_custom_call.1} parent=1 // pred_check_branch
      %11 = sbr.rel (0) target = $region5
    $region4: #{tpu_custom_call.1} parent=1 // pred_region
      %s12 = sadd.s32 0, 0
      %p13 = scmp.lt.s32.totalorder %s12, 0
      %s14 = scalar_select %p13, %s12, 0
      %s15 = smul.u32 2, %s14
      %s17 = ssub.s32 256, 256
      %18 = vsyncadd [#allocation4], %s17
      %s19 = smul.addr %s15, 128
      %s20 = scalar_lea.hbm %s0, %s19
      %s21 = sshll.u32 [#allocation3], 4
      %s22 = int_to_ptr.vmem [resolvable:$true] %s21
      %27 = dma.hbm_to_vmem [thread:$0]  %s20, 256, %s22, [#allocation4], 128, 128, 8
    $region5: #{tpu_custom_call.1} parent=1 // pred_fallthru
      _
    // Predicated region
    $region6: #{tpu_custom_call.1} parent=1 // pred_check
      _
    $region7: #{tpu_custom_call.1} parent=1 // pred_check_branch
      %29 = sbr.rel (0) target = $region9
    $region8: #{tpu_custom_call.1} parent=1 // pred_region
      %s30 = sadd.s32 0, 0
      %p31 = scmp.lt.s32.totalorder %s30, 0
      %s32 = scalar_select %p31, %s30, 0
      %s33 = smul.u32 2, %s32
      %s35 = ssub.s32 256, 256
      %36 = vsyncadd [#allocation7], %s35
      %s37 = smul.addr %s33, 128
      %s38 = scalar_lea.hbm %s1, %s37
      %s39 = sshll.u32 [#allocation6], 4
      %s40 = int_to_ptr.vmem [resolvable:$true] %s39
      %45 = dma.hbm_to_vmem [thread:$0]  %s38, 256, %s40, [#allocation7], 128, 128, 8
    $region9: #{tpu_custom_call.1} parent=1 // pred_fallthru
      _
    // Predicated region
    $region10: #{tpu_custom_call.1} parent=1 // pred_check
      _
    $region11: #{tpu_custom_call.1} parent=1 // pred_check_branch
      %47 = sbr.rel (0) target = $region13
    $region12: #{tpu_custom_call.1} parent=1 // pred_region
      %48 = dma.done [#allocation4], 256
    $region13: #{tpu_custom_call.1} parent=1 // pred_fallthru
      _
    // Predicated region
    $region14: #{tpu_custom_call.1} parent=1 // pred_check
      _
    $region15: #{tpu_custom_call.1} parent=1 // pred_check_branch
      %50 = sbr.rel (0) target = $region17
    $region16: #{tpu_custom_call.1} parent=1 // pred_region
      %51 = dma.done [#allocation7], 256
    $region17: #{tpu_custom_call.1} parent=1 // pred_fallthru
      _
    %s52 = sadd.s32 0, 0
    %p53 = scmp.lt.s32.totalorder %s52, 0
    %s54 = scalar_select %p53, %s52, 0
    %s55 = smul.u32 2, %s54
    %s56 = sadd.s32 0, 0
    %p57 = scmp.lt.s32.totalorder %s56, 0
    %s58 = scalar_select %p57, %s56, 0
    %s59 = smul.u32 2, %s58
    %p60 = scmp.eq.s32.totalorder 0, 0
    // Predicated region
    $region18: #{tpu_custom_call.1} parent=1 // pred_check
      %p61 = pneg %p60
    $region19: #{tpu_custom_call.1} parent=1 // pred_check_branch
      %63 = sbr.rel (%p61) target = $region21
    $region20: #{tpu_custom_call.1} parent=1 // pred_region
      %64 = vst [vmem:[#allocation2] sm:$0xff] 0.0
    $region21: #{tpu_custom_call.1} parent=1 // pred_fallthru
      _
    %s65 = sadd.s32 0, 0
    %s66 = smul.u32 %s65, 16
    %v67 = vlaneseq
    %v68 = vshrl.u32 %v67, 7
    %v69 = vadd.s32 %v68, 8
    %v70 = vld [vmem:[#allocation3] sm:$0xff]
    %v71 = vld [vmem:[#allocation3 + $0x8] sm:$0xff]
    %v72 = vld [vmem:[#allocation6] sm:$0xff]
    %v73 = vld [vmem:[#allocation6 + $0x8] sm:$0xff]
    %v74 = vsub.f32 %v70, %v72
    %v75 = vsub.f32 %v71, %v73
    %v76 = vand.u32 2147483647, %v74
    %v77 = vand.u32 2147483647, %v75
    %v78 = vmin.f32 %v76, 1.0
    %v79 = vmin.f32 %v77, 1.0
    %v80 = vmul.f32 %v78, 0.5
    %v81 = vmul.f32 %v79, 0.5
    %v82 = vsub.f32 %v76, %v80
    %v83 = vsub.f32 %v77, %v81
    %v84 = vmul.f32 %v78, %v82
    %v85 = vmul.f32 %v79, %v83
    %s86 = sadd.s32 %s66, 0
    %v87 = vstv %s86
    %v88 = vadd.s32 %v87, %v68
    %v89 = vadd.s32 %v87, %v69
    %vm90 = vcmp.lt.s32.totalorder %v88, 16
    %vm91 = vcmp.lt.s32.totalorder %v89, 16
    %v92 = vsel %vm90, %v84, 0.0
    %v93 = vsel %vm91, %v85, 0.0
    %v94 = vadd.f32 %v92, %v93
    %v95 = vadd.f32 %v94, 0.0
    %v96 = vld [vmem:[#allocation2] sm:$0xff]
    %v97 = vadd.f32 %v96, %v95
    %98 = vst [vmem:[#allocation2] sm:$0xff] %v97
    // Predicated region
    $region22: #{tpu_custom_call.1} parent=1 // pred_check
      %p99 = pneg %p60
    $region23: #{tpu_custom_call.1} parent=1 // pred_check_branch
      %101 = sbr.rel (%p99) target = $region25
    $region24: #{tpu_custom_call.1} parent=1 // pred_region
      %v102 = vld [vmem:[#allocation2] sm:$0xff]
      %v103 = vrot.slane %v102, 4
      %v104 = vadd.f32 %v102, %v103
      %v105 = vrot.slane %v104, 2
      %v106 = vadd.f32 %v104, %v105
      %v107 = vrot.slane %v106, 1
      %v108 = vadd.f32 %v106, %v107
      %109 = vst [vmem:[#allocation8] sm:$0x1] %v108
    $region25: #{tpu_custom_call.1} parent=1 // pred_fallthru
      _
    // Predicated region
    $region26: #{tpu_custom_call.1} parent=1 // pred_check
      _
    $region27: #{tpu_custom_call.1} parent=1 // pred_check_branch
      %111 = sbr.rel (0) target = $region29
    $region28: #{tpu_custom_call.1} parent=1 // pred_region
      %s113 = ssub.s32 16, 16
      %114 = vsyncadd [#allocation5], %s113
      %s116 = sshll.u32 [#allocation8], 4
      %s117 = int_to_ptr.vmem [resolvable:$true] %s116
      %119 = dma.vmem_to_hbm [thread:$0]  %s117, 16, %s2, [#allocation5]
    $region29: #{tpu_custom_call.1} parent=1 // pred_fallthru
      _
    // Predicated region
    $region30: #{tpu_custom_call.1} parent=1 // pred_check
      _
    $region31: #{tpu_custom_call.1} parent=1 // pred_check_branch
      %121 = sbr.rel (0) target = $region33
    $region32: #{tpu_custom_call.1} parent=1 // pred_region
      %122 = dma.done [#allocation5], 16
    $region33: #{tpu_custom_call.1} parent=1 // pred_fallthru
      _
    %123 = vsyncpa [#allocation4], 1
    %124 = vsyncpa [#allocation7], 1
    %125 = vsyncpa [#allocation5], 1

</llo_original>
